<compile_context>
chip_gen: v7x
topology: tpu7x:2x2x1
jax: 0.10.0
libtpu: 0.0.40
codegen_flags: <defaults>
</compile_context>

<pallas_src>
import functools

import jax
import jax.numpy as jnp
from jax.experimental import pallas as pl
from jax.experimental.pallas import tpu as pltpu


# ---------------------------------------------------------------------------
# helpers
# ---------------------------------------------------------------------------

def _round_up(v, m):
    return (v + m - 1) // m * m


def _vmem_capacity_bytes():
    """Physical VMEM per TensorCore (128 MiB v5e/v6e, 64 MiB v7x); safe fallback."""
    try:
        cap = getattr(pltpu.get_tpu_info(), "vmem_capacity_bytes", None)
        if cap:
            return int(cap)
    except Exception:
        pass
    return 64 * 1024 * 1024          # assume the smallest generation (v7x)


def _largest_tile(extent, multiple, cap):
    """Largest divisor of `extent` that is a multiple of `multiple` and <= `cap`.

    Falls back to `multiple` (smallest legal tile) if `cap` is tiny, and to the
    full extent when `extent` is not a multiple of `multiple` (full-extent
    blocks are always legal w.r.t. the (8, 128) rule)."""
    if extent % multiple != 0:
        return extent
    best = multiple
    d = multiple
    limit = min(max(cap, multiple), extent)
    while d <= limit:
        if extent % d == 0:
            best = d
        d += multiple
    return best


def _mosaic_params(semantics, need_bytes, vmem_cap):
    limit = int(min(vmem_cap - (8 << 20), max(need_bytes, 16 << 20)))
    return pltpu.CompilerParams(dimension_semantics=semantics,
                                vmem_limit_bytes=limit)


# ---------------------------------------------------------------------------
# kernels
# ---------------------------------------------------------------------------

def _fused_kernel(x_ref, w_ref, o_ref, *, inv_hw):
    """Single-pass SE gate for one batch element.

    x_ref / o_ref: (1, C, HW) in the input dtype; w_ref: (C, C) resident weight.
    Reads x once, writes the gated result once.
    """
    xf = x_ref[...].astype(jnp.float32)                       # cast streams on the VPU
    pooled = jnp.sum(xf, axis=-1) * inv_hw                    # (1, C): global avg-pool
    wf = w_ref[...].astype(jnp.float32)                       # (C_out, C_in)
    z = jnp.sum(wf * pooled, axis=-1, keepdims=True)          # (C_out, 1) = W @ pooled
    gate = (1.0 / (1.0 + jnp.exp(-z))).astype(o_ref.dtype)    # sigmoid in f32, cast back
    o_ref[...] = x_ref[...] * gate[None, :, :]                # lane-broadcast multiply


def _pool_kernel(x_ref, pooled_ref, *, inv_hw):
    """Tiled mean over HW; pooled_ref is a resident f32 accumulator over axis 1."""
    t = pl.program_id(1)

    @pl.when(t == 0)
    def _():
        pooled_ref[...] = jnp.zeros_like(pooled_ref)

    pooled_ref[...] += jnp.sum(x_ref[...].astype(jnp.float32), axis=-1, keepdims=True)

    @pl.when(t == pl.num_programs(1) - 1)
    def _():
        pooled_ref[...] = pooled_ref[...] * inv_hw


def _apply_kernel(x_ref, gate_ref, o_ref):
    """Pure stream: out = x * per-row gate (gate block resident across lane tiles)."""
    o_ref[...] = x_ref[...] * gate_ref[...]


# ---------------------------------------------------------------------------
# wrapper
# ---------------------------------------------------------------------------

@functools.partial(jax.jit, static_argnames=("force_two_pass",))
def channel_operation(x_nchw, weight, force_two_pass=False):
    """ChannelOperation forward.

    x_nchw: (N, C, H, W); weight: (C, C) = Conv2d(dim, dim, 1, bias=False) weight squeezed.
    """
    N, C, H, W = x_nchw.shape
    HW = H * W
    itemsize = jnp.dtype(x_nchw.dtype).itemsize
    sub = 8 * max(1, 32 // (itemsize * 8))    # sublane packing: 8 (f32) / 16 (bf16) / 32 (i8)

    vmem_cap = _vmem_capacity_bytes()
    budget = vmem_cap // 2                    # headroom for compiler scratch / semaphores

    # ---- fused single-pass path: one (1, C, HW) slice resident per grid step ----
    c_pad = _round_up(C, sub)
    hw_pad = _round_up(HW, 128)
    blk_f = c_pad * hw_pad * itemsize
    # 2x double-buffered input + 2x double-buffered output + f32 cast copy + weight + margin
    fused_need = (4 * blk_f + c_pad * hw_pad * 4
                  + 2 * c_pad * _round_up(C, 128) * itemsize + (2 << 20))

    if (not force_two_pass) and fused_need <= budget:
        x = x_nchw.reshape(N, C, HW)                       # free reshape, no transpose
        out = pl.pallas_call(
            functools.partial(_fused_kernel, inv_hw=1.0 / HW),
            out_shape=jax.ShapeDtypeStruct((N, C, HW), x.dtype),
            grid_spec=pltpu.PrefetchScalarGridSpec(
                num_scalar_prefetch=0,
                grid=(N,),
                in_specs=[
                    pl.BlockSpec((1, C, HW), lambda n: (n, 0, 0)),
                    pl.BlockSpec((C, C), lambda n: (0, 0)),      # weight stays resident
                ],
                out_specs=pl.BlockSpec((1, C, HW), lambda n: (n, 0, 0)),
            ),
            compiler_params=_mosaic_params(("parallel",), fused_need, vmem_cap),
        )(x, weight)
        return out.reshape(N, C, H, W)

    # ---- two-pass fallback for large feature maps: pool -> tiny gate -> apply ----
    # Flat (N*C, HW) view: dense sublanes for any C, HW lane-dense (unmasked vst),
    # and the row axis becomes a natural megacore-parallel grid dimension.
    rows = N * C
    x2 = x_nchw.reshape(rows, HW)                          # free reshape

    block_target = min(budget // 6, 4 << 20)               # ~85%+ of HBM roofline
    t_tile = _largest_tile(HW, 128, max(block_target // (sub * itemsize), 128))
    t_pad = _round_up(t_tile, 128)
    r_tile = _largest_tile(rows, sub, max(block_target // (t_pad * itemsize), sub))
    r_pad = _round_up(r_tile, sub)
    blk = r_pad * t_pad * itemsize
    need = 6 * blk + (2 << 20)

    # 1) pooled[r] = mean_hw x2[r, :]   (rows parallel across TCs, HW tiles reduced)
    pooled = pl.pallas_call(
        functools.partial(_pool_kernel, inv_hw=1.0 / HW),
        out_shape=jax.ShapeDtypeStruct((rows, 1), jnp.float32),
        grid_spec=pltpu.PrefetchScalarGridSpec(
            num_scalar_prefetch=0,
            grid=(rows // r_tile, HW // t_tile),
            in_specs=[pl.BlockSpec((r_tile, t_tile), lambda r, t: (r, t))],
            out_specs=pl.BlockSpec((r_tile, 1), lambda r, t: (r, 0)),
        ),
        compiler_params=_mosaic_params(("parallel", "arbitrary"), need, vmem_cap),
    )(x2)

    # 2) tiny O(N*C^2) gate in XLA.  The two-pass path only triggers for large HW,
    #    where this extra dispatch is noise next to the two x streams.
    gate = jax.nn.sigmoid(pooled.reshape(N, C) @ weight.astype(jnp.float32).T)
    gate2 = gate.astype(x2.dtype).reshape(rows, 1)

    # 3) out = x * gate   (pure stream, both grid axes megacore-parallel)
    out2 = pl.pallas_call(
        _apply_kernel,
        out_shape=jax.ShapeDtypeStruct((rows, HW), x2.dtype),
        grid_spec=pltpu.PrefetchScalarGridSpec(
            num_scalar_prefetch=0,
            grid=(rows // r_tile, HW // t_tile),
            in_specs=[
                pl.BlockSpec((r_tile, t_tile), lambda r, t: (r, t)),
                pl.BlockSpec((r_tile, 1), lambda r, t: (r, 0)),   # gate resident over t
            ],
            out_specs=pl.BlockSpec((r_tile, t_tile), lambda r, t: (r, t)),
        ),
        compiler_params=_mosaic_params(("parallel", "parallel"), need, vmem_cap),
    )(x2, gate2)

    return out2.reshape(N, C, H, W)


def _reference(x_nchw, weight):
    # pure-JAX reference of the PyTorch forward
    pooled = jnp.mean(x_nchw.astype(jnp.float32), axis=(2, 3))        # (N, C)
    gate = jax.nn.sigmoid(pooled @ weight.astype(jnp.float32).T)      # (N, C)
    return x_nchw * gate.astype(x_nchw.dtype)[:, :, None, None]


if __name__ == "__main__":
    key = jax.random.PRNGKey(0)
    kx, kw = jax.random.split(key)

    N, C, H, W = 2, 4, 16, 16
    x = jax.random.normal(kx, (N, C, H, W), dtype=jnp.float32)
    # Conv2d(dim, dim, 1, 1, 0, bias=False) weight: (C, C, 1, 1) -> squeeze to (C, C)
    weight = 0.1 * jax.random.normal(kw, (C, C), dtype=jnp.float32)

    ref = _reference(x, weight)

    # fused single-read path (small feature map fits the VMEM budget)
    out = jax.block_until_ready(channel_operation(x, weight))
    assert out.shape == (N, C, H, W)
    assert jnp.allclose(out, ref, atol=1e-5, rtol=1e-5)

    # two-pass streaming path (forced, so both code paths are compiled and verified)
    out2 = jax.block_until_ready(channel_operation(x, weight, force_two_pass=True))
    assert jnp.allclose(out2, ref, atol=1e-5, rtol=1e-5)

    print("KERNEL_OK")
</pallas_src>

<mosaic_0001>
module attributes {stable_mosaic.version = 11 : i64} {
  func.func @_fused_kernel(%arg0: i32, %arg1: memref<1x4x256xf32, #tpu.memory_space<vmem>>, %arg2: memref<4x4xf32, #tpu.memory_space<vmem>>, %arg3: memref<1x4x256xf32, #tpu.memory_space<vmem>>) attributes {dimension_semantics = [#tpu.dimension_semantics<parallel>], iteration_bounds = array<i64: 2>, scalar_prefetch = 0 : i64, scratch_operands = 0 : i64, tpu.core_type = #tpu.core_type<tc>, window_params = [{transform_indices = @transform_0, window_bounds = array<i64: 1, 4, 256>}, {pipeline_mode = #tpu.pipeline_mode<synchronous>, transform_indices = @transform_1, window_bounds = array<i64: 4, 4>}, {transform_indices = @transform_2, window_bounds = array<i64: 1, 4, 256>}]} {
    %c0 = arith.constant 0 : index
    %c0_0 = arith.constant 0 : index
    %c0_1 = arith.constant 0 : index
    %0 = vector.load %arg1[%c0, %c0_0, %c0_1] : memref<1x4x256xf32, #tpu.memory_space<vmem>>, vector<1x4x256xf32>
    %cst = arith.constant dense<0.000000e+00> : vector<1x4xf32>
    %1 = vector.multi_reduction <add>, %0, %cst [2] : vector<1x4x256xf32> to vector<1x4xf32>
    %cst_2 = arith.constant 3.906250e-03 : f32
    %2 = vector.broadcast %cst_2 : f32 to vector<1x4xf32>
    %3 = arith.mulf %1, %2 : vector<1x4xf32>
    %c0_3 = arith.constant 0 : index
    %c0_4 = arith.constant 0 : index
    %4 = vector.load %arg2[%c0_3, %c0_4] : memref<4x4xf32, #tpu.memory_space<vmem>>, vector<4x4xf32>
    %5 = vector.broadcast %3 : vector<1x4xf32> to vector<4x4xf32>
    %6 = arith.mulf %4, %5 : vector<4x4xf32>
    %cst_5 = arith.constant dense<0.000000e+00> : vector<4xf32>
    %7 = vector.multi_reduction <add>, %6, %cst_5 [1] : vector<4x4xf32> to vector<4xf32>
    %8 = vector.shape_cast %7 : vector<4xf32> to vector<4x1xf32>
    %cst_6 = arith.constant 0.000000e+00 : f32
    %9 = vector.broadcast %cst_6 : f32 to vector<4x1xf32>
    %10 = arith.subf %9, %8 : vector<4x1xf32>
    %11 = math.exp %10 : vector<4x1xf32>
    %cst_7 = arith.constant 1.000000e+00 : f32
    %12 = vector.broadcast %cst_7 : f32 to vector<4x1xf32>
    %13 = arith.addf %12, %11 : vector<4x1xf32>
    %cst_8 = arith.constant 1.000000e+00 : f32
    %14 = vector.broadcast %cst_8 : f32 to vector<4x1xf32>
    %15 = arith.divf %14, %13 : vector<4x1xf32>
    %c0_9 = arith.constant 0 : index
    %c0_10 = arith.constant 0 : index
    %c0_11 = arith.constant 0 : index
    %16 = vector.load %arg1[%c0_9, %c0_10, %c0_11] : memref<1x4x256xf32, #tpu.memory_space<vmem>>, vector<1x4x256xf32>
    %17 = vector.shape_cast %15 : vector<4x1xf32> to vector<1x4x1xf32>
    %18 = vector.broadcast %17 : vector<1x4x1xf32> to vector<1x4x256xf32>
    %19 = arith.mulf %16, %18 : vector<1x4x256xf32>
    %c0_12 = arith.constant 0 : index
    %c0_13 = arith.constant 0 : index
    %c0_14 = arith.constant 0 : index
    %20 = vector.load %arg3[%c0_12, %c0_13, %c0_14] : memref<1x4x256xf32, #tpu.memory_space<vmem>>, vector<1x4x256xf32>
    tpu.vector_store %arg3[%c0_12, %c0_13, %c0_14], %19 {strides = array<i32>} : memref<1x4x256xf32, #tpu.memory_space<vmem>>, vector<1x4x256xf32>,
    return
  }
  func.func @transform_0(%arg0: i32) -> (i32, i32, i32) {
    %c0_i32 = arith.constant 0 : i32
    %c0_i32_0 = arith.constant 0 : i32
    %c0_i32_1 = arith.constant 0 : i32
    return %arg0, %c0_i32, %c0_i32_0 : i32, i32, i32
  }
  func.func @transform_1(%arg0: i32) -> (i32, i32) {
    %c0_i32 = arith.constant 0 : i32
    %c0_i32_0 = arith.constant 0 : i32
    %c0_i32_1 = arith.constant 0 : i32
    return %c0_i32, %c0_i32_0 : i32, i32
  }
  func.func @transform_2(%arg0: i32) -> (i32, i32, i32) {
    %c0_i32 = arith.constant 0 : i32
    %c0_i32_0 = arith.constant 0 : i32
    %c0_i32_1 = arith.constant 0 : i32
    return %arg0, %c0_i32, %c0_i32_0 : i32, i32, i32
  }
}

</mosaic_0001>

<llo_original>
// kernel: channel_operation.1
$region0: #{channel_operation.1}
  #allocation0 [shape = 'u32[]', space=smem, size = 0x4, offset = 0x4, fixed_abs, tag = 'smem constant byte address 0x4 - core index']
  #allocation1 [shape = 'u32[144,128]{1,0:T(1,128)}', space=vmem, size = 0x12000, scoped, tag = 'internal scratch']
  %s0 = inlined_call_operand.vmem [shape: f32[2,4,256], index: 0, kind: input, shape index: {}]
  %s1 = inlined_call_operand.vmem [shape: f32[4,4], index: 1, kind: input, shape index: {}]
  %s2 = inlined_call_operand.vmem [shape: f32[2,4,256], index: 2, kind: output, shape index: {}]
  %s3 = sld [smem:[#allocation0]]
  $region41: #{channel_operation.1} parent=0
    _
  %s5 = ssub.s32 1, %s3
  %s6 = scalar_select 0, %s5, %s3
  loop: start=0, step=1, limit=4
  $region2: #{channel_operation.1} parent=0 // loop_pre_header
    _
  $region3: #{channel_operation.1} parent=0 // loop_header
    %s8 = sphi 0, %s12
    %p9 = scmp.ge.s32.totalorder %s8, 4
    %s18 = sphi 0, %s20
    %s21 = sphi 0, %s18
    %s22 = sphi 0, %s21
    %s38 = sphi 0, %s22
    %s42 = sphi 0, %s42
    %s44 = sphi 0, %s42
    %s45 = sphi 0, %s44
    %s59 = sphi 0, %s45
    %s65 = sphi 0, %s67
    %s68 = sphi 0, %s65
    %s69 = sphi 0, %s68
    %s85 = sphi 0, %s69
  $region4: #{channel_operation.1} parent=0 // loop_header_branch
    %11 = sbr.rel (%p9) target = $region8
  $region5: #{channel_operation.1} parent=0 // loop_body
    %s13 = ssub.s32 %s8, 1
    %s14 = ssub.s32 %s8, 2
    %s15 = sadd.s32 %s8, 1
    %s16 = ssub.s32 %s8, %s15
    %p17 = scmp.eq.s32.totalorder %s16, 0
    %s19 = sadd.s32 %s18, 1
    %s20 = scalar_select %p17, %s18, %s19
    %p23 = pneg %p17
    %p24 = scmp.eq.s32.totalorder %s8, 1
    %p25 = por %p23, %p24
    %p26 = scmp.ne.s32.totalorder %s18, %s21
    %p27 = scmp.eq.s32.totalorder %s8, 0
    %p28 = por %p26, %p27
    %p29 = scmp.ne.s32.totalorder %s18, %s21
    %p30 = scmp.eq.s32.totalorder %s13, 1
    %p31 = por %p29, %p30
    %p32 = scmp.ne.s32.totalorder %s21, %s22
    %p33 = scmp.eq.s32.totalorder %s13, 0
    %p34 = por %p32, %p33
    %p35 = scmp.ne.s32.totalorder %s21, %s22
    %p36 = scmp.eq.s32.totalorder %s14, 1
    %p37 = por %p35, %p36
    %p39 = scmp.ne.s32.totalorder %s22, %s38
    %p40 = scmp.eq.s32.totalorder %s14, 0
    %p41 = por %p39, %p40
    %s43 = sadd.s32 %s42, 1
    %p46 = scmp.eq.s32.totalorder %s8, 1
    %p47 = scmp.ne.s32.totalorder %s42, %s44
    %p48 = scmp.eq.s32.totalorder %s8, 0
    %p49 = por %p47, %p48
    %p50 = scmp.ne.s32.totalorder %s42, %s44
    %p51 = scmp.eq.s32.totalorder %s13, 1
    %p52 = por %p50, %p51
    %p53 = scmp.ne.s32.totalorder %s44, %s45
    %p54 = scmp.eq.s32.totalorder %s13, 0
    %p55 = por %p53, %p54
    %p56 = scmp.ne.s32.totalorder %s44, %s45
    %p57 = scmp.eq.s32.totalorder %s14, 1
    %p58 = por %p56, %p57
    %p60 = scmp.ne.s32.totalorder %s45, %s59
    %p61 = scmp.eq.s32.totalorder %s14, 0
    %p62 = por %p60, %p61
    %s63 = ssub.s32 %s8, %s15
    %p64 = scmp.eq.s32.totalorder %s63, 0
    %s66 = sadd.s32 %s65, 1
    %s67 = scalar_select %p64, %s65, %s66
    %p70 = pneg %p64
    %p71 = scmp.eq.s32.totalorder %s8, 1
    %p72 = por %p70, %p71
    %p73 = scmp.ne.s32.totalorder %s65, %s68
    %p74 = scmp.eq.s32.totalorder %s8, 0
    %p75 = por %p73, %p74
    %p76 = scmp.ne.s32.totalorder %s65, %s68
    %p77 = scmp.eq.s32.totalorder %s13, 1
    %p78 = por %p76, %p77
    %p79 = scmp.ne.s32.totalorder %s68, %s69
    %p80 = scmp.eq.s32.totalorder %s13, 0
    %p81 = por %p79, %p80
    %p82 = scmp.ne.s32.totalorder %s68, %s69
    %p83 = scmp.eq.s32.totalorder %s14, 1
    %p84 = por %p82, %p83
    %p86 = scmp.ne.s32.totalorder %s69, %s85
    %p87 = scmp.eq.s32.totalorder %s14, 0
    %p88 = por %p86, %p87
    %p89 = scmp.le.s32.totalorder 1, %s8
    %p90 = scmp.lt.s32.totalorder %s8, 3
    %p91 = pnand %p89, %p90
    %p92 = pneg %p91
    // Predicated region
    $region9: #{channel_operation.1} parent=5 // pred_check
      _
    $region10: #{channel_operation.1} parent=5 // pred_check_branch
      %94 = sbr.rel (%p91) target = $region12
    $region11: #{channel_operation.1} parent=5 // pred_region
      %s95 = ssub.s32 %s8, 1
      // Predicated region
      $region13: #{channel_operation.1} parent=11 // pred_check
        %p96 = pneg %p55
      $region14: #{channel_operation.1} parent=11 // pred_check_branch
        %98 = sbr.rel (%p96) target = $region16
      $region15: #{channel_operation.1} parent=11 // pred_region
        _
      $region16: #{channel_operation.1} parent=11 // pred_fallthru
        _
    $region12: #{channel_operation.1} parent=5 // pred_fallthru
      _
    %p99 = scmp.lt.s32.totalorder %s8, 2
    // Predicated region
    $region17: #{channel_operation.1} parent=5 // pred_check
      %p100 = pneg %p99
    $region18: #{channel_operation.1} parent=5 // pred_check_branch
      %102 = sbr.rel (%p100) target = $region20
    $region19: #{channel_operation.1} parent=5 // pred_region
      // Predicated region
      $region21: #{channel_operation.1} parent=19 // pred_check
        %p103 = pneg %p28
      $region22: #{channel_operation.1} parent=19 // pred_check_branch
        %105 = sbr.rel (%p103) target = $region24
      $region23: #{channel_operation.1} parent=19 // pred_region
        %p106 = scmp.lt.s32.totalorder %s8, 1
        %s107 = scalar_select %p106, %s8, 1
        %s108 = smul.addr %s107, 2
        %s109 = smul.addr %s108, 4
        %s110 = scalar_lea.vmem %s0, %s109
      $region24: #{channel_operation.1} parent=19 // pred_fallthru
        _
    $region20: #{channel_operation.1} parent=5 // pred_fallthru
      _
    %p111 = scmp.le.s32.totalorder 1, %s8
    %p112 = scmp.lt.s32.totalorder %s8, 3
    %p113 = pnand %p111, %p112
    %p114 = pneg %p113
    // Predicated region
    $region25: #{channel_operation.1} parent=5 // pred_check
      _
    $region26: #{channel_operation.1} parent=5 // pred_check_branch
      %116 = sbr.rel (%p113) target = $region28
    $region27: #{channel_operation.1} parent=5 // pred_region
      %s117 = ssub.s32 %s8, 1
      %p118 = scmp.lt.s32.totalorder %s13, 1
      %s119 = scalar_select %p118, %s13, 1
      %s120 = smul.addr %s119, 2
      %s121 = smul.addr %s120, 4
      %s122 = scalar_lea.vmem %s0, %s121
      %p123 = pneg %p34
      %p124 = pneg %p31
      %p125 = pneg %p55
      %p126 = pneg %p52
      %p127 = pneg %p81
      %p128 = pneg %p78
      %p129 = scmp.lt.s32.totalorder %s13, 1
      %s130 = scalar_select %p129, %s13, 1
      %s131 = smul.addr %s130, 2
      %s132 = smul.addr %s131, 4
      %s133 = scalar_lea.vmem %s2, %s132
      %p134 = scmp.lt.s32.totalorder %s13, 1
      %s135 = scalar_select %p134, %s13, 1
      %s136 = smul.addr %s135, 2
      %s137 = smul.addr %s136, 4
      %s138 = scalar_lea.vmem %s0, %s137
      %p139 = scmp.lt.s32.totalorder %s13, 1
      %s140 = scalar_select %p139, %s13, 1
      %s141 = smul.addr %s140, 2
      %s142 = smul.addr %s141, 4
      %s143 = scalar_lea.vmem %s2, %s142
      %v144 = vld [vmem:[%s138] sm:$0xff]
      %v146 = vcombine.high %v144, %v144
      %vm148 = vcmask 1043456
      %v149 = vsel %vm148, %v144, 0.0
      %v150 = vsel %vm148, %v146, 0.0
      %v151 = vadd.f32 %v149, %v150
      %152 = vadd.xlane.f32.xlu0 %v151
      %v153 = vpop.xlane.xlu0 %152
      %v154 = vmul.f32 %v153, 0.00390625
      %v155 = vld [vmem:[%s1] sm:$0xf]
      %v157 = vlaneseq
      %v158 = vand.u32 %v157, 127
      %v159 = vlaneseq
      %v160 = vshrl.u32 %v159, 7
      %v161 = vsub.s32 %v158, %v160
      %v162 = vrot.slane %v154, %v161
      %vm163 = vcmask 1042434
      %v164 = vsel %vm163, %v162, %v162
      %vm165 = vcmask 1043459
      %v166 = vsel %vm165, %v162, %v164
      %v168 = vmul.f32 %v155, %v166
      %vm169 = vcmask 27648
      %v170 = vsel %vm169, %v168, 0.0
      %171 = vadd.xlane.f32.xlu0 %v170
      %v172 = vpop.xlane.xlu0 %171
      %v173 = vsub.f32 0.0, %v172
      %v174 = vmul.f32 %v173, 1.442695
      %v175 = vpow.pop %v174
      %v176 = vadd.f32 %v175, 1.0
      %v177 = vrcp.pop %v176
      %v178 = vmul.f32 1.0, %v177
      %v181 = vunpack.c.l.s4 839922192
      %v182 = vunpack.c.0.s8 %v181
      %v183 = vlaneseq
      %v184 = vshrl.u32 %v183, 7
      %v185 = vsub.s32 %v182, %v184
      %v186 = vrot.slane %v178, %v185
      %v188 = vmul.f32 %v144, %v186
      %189 = vst [vmem:[%s143] sm:$0xff] %v188
      %p190 = scmp.lt.s32.totalorder %s13, 1
      %s191 = scalar_select %p190, %s13, 1
      %s192 = smul.addr %s191, 2
      %s193 = smul.addr %s192, 4
      %s194 = scalar_lea.vmem %s2, %s193
      // Predicated region
      $region29: #{channel_operation.1} parent=27 // pred_check
        %p195 = pneg %p78
      $region30: #{channel_operation.1} parent=27 // pred_check_branch
        %197 = sbr.rel (%p195) target = $region32
      $region31: #{channel_operation.1} parent=27 // pred_region
        _
      $region32: #{channel_operation.1} parent=27 // pred_fallthru
        _
    $region28: #{channel_operation.1} parent=5 // pred_fallthru
      _
    %p198 = scmp.le.s32.totalorder 2, %s8
    // Predicated region
    $region33: #{channel_operation.1} parent=5 // pred_check
      %p199 = pneg %p198
    $region34: #{channel_operation.1} parent=5 // pred_check_branch
      %201 = sbr.rel (%p199) target = $region36
    $region35: #{channel_operation.1} parent=5 // pred_region
      %s202 = ssub.s32 %s8, 2
      // Predicated region
      $region37: #{channel_operation.1} parent=35 // pred_check
        %p203 = pneg %p84
      $region38: #{channel_operation.1} parent=35 // pred_check_branch
        %205 = sbr.rel (%p203) target = $region40
      $region39: #{channel_operation.1} parent=35 // pred_region
        %p206 = scmp.lt.s32.totalorder %s14, 1
        %s207 = scalar_select %p206, %s14, 1
        %s208 = smul.addr %s207, 2
        %s209 = smul.addr %s208, 4
        %s210 = scalar_lea.vmem %s2, %s209
      $region40: #{channel_operation.1} parent=35 // pred_fallthru
        _
    $region36: #{channel_operation.1} parent=5 // pred_fallthru
      _
  $region6: #{channel_operation.1} parent=0 // loop_footer
    %s12 = sadd.s32 1, %s8
  $region7: #{channel_operation.1} parent=0 // loop_footer_branch
    %7 = sbr.rel target = $region3
  $region8: #{channel_operation.1} parent=0 // loop_exit
    _

</llo_original>
